<compile_context>
chip_gen: v7x
topology: tpu7x:2x2x1
jax: 0.10.0
libtpu: 0.0.40
codegen_flags: <defaults>
</compile_context>

<pallas_src>
import jax
import jax.numpy as jnp
import numpy as np
from jax.experimental import pallas as pl
from jax.experimental.pallas import tpu as pltpu

HIDDEN = 256


def _double_critic_kernel(s_ref, w14_ref, b14_ref, w2_ref, b2_ref,
                          w5_ref, b5_ref, w36_ref, b36_ref, out_ref):
    # Layer 1, both critics fused along lanes: [TB, S] @ [S, 512] -> [TB, 512]
    s = s_ref[...].astype(jnp.bfloat16)
    h = jnp.dot(s, w14_ref[...], preferred_element_type=jnp.float32) + b14_ref[...]
    h = jnp.maximum(h, 0.0).astype(jnp.bfloat16)
    h1 = h[:, :HIDDEN]          # critic 1 hidden
    h2 = h[:, HIDDEN:]          # critic 2 hidden

    # Layer 2, per critic: [TB, 256] @ [256, 256] -> [TB, 256]
    g1 = jnp.dot(h1, w2_ref[...], preferred_element_type=jnp.float32) + b2_ref[...]
    g1 = jnp.maximum(g1, 0.0)
    g2 = jnp.dot(h2, w5_ref[...], preferred_element_type=jnp.float32) + b5_ref[...]
    g2 = jnp.maximum(g2, 0.0)
    g = jnp.concatenate([g1, g2], axis=-1).astype(jnp.bfloat16)   # [TB, 512]

    # Layer 3, both heads as one block-diagonal matmul: [TB, 512] @ [512, 2] -> [TB, 2]
    out_ref[...] = (jnp.dot(g, w36_ref[...], preferred_element_type=jnp.float32)
                    + b36_ref[...])


def _round_up(x, m):
    return ((x + m - 1) // m) * m


def double_critic_forward(state, packed, *, tile_b=512):
    """state: [B, state_dim] f32. packed: dict from pack_double_critic_params.

    Returns (v1, v2), each [B, 1] f32 — same as Double_Critic.forward.
    """
    B, state_dim = state.shape
    tb = min(tile_b, _round_up(B, 8))        # sublane dim must be a multiple of 8
    bp = _round_up(B, tb)
    if bp != B:
        state = jnp.pad(state, ((0, bp - B), (0, 0)))
    grid = (bp // tb,)

    def resident(i):                          # same block every step -> fetched once
        return (0, 0)

    in_specs = [
        pl.BlockSpec((tb, state_dim), lambda i: (i, 0)),     # state tile (pipelined)
        pl.BlockSpec(packed["w14"].shape, resident),
        pl.BlockSpec(packed["b14"].shape, resident),
        pl.BlockSpec(packed["w2"].shape, resident),
        pl.BlockSpec(packed["b2"].shape, resident),
        pl.BlockSpec(packed["w5"].shape, resident),
        pl.BlockSpec(packed["b5"].shape, resident),
        pl.BlockSpec(packed["w36"].shape, resident),
        pl.BlockSpec(packed["b36"].shape, resident),
    ]
    out = pl.pallas_call(
        _double_critic_kernel,
        out_shape=jax.ShapeDtypeStruct((bp, 2), jnp.float32),
        grid=grid,
        in_specs=in_specs,
        out_specs=pl.BlockSpec((tb, 2), lambda i: (i, 0)),
        compiler_params=pltpu.CompilerParams(
            dimension_semantics=("parallel",)),   # v7x: split batch tiles over 2 TCs
    )(state, packed["w14"], packed["b14"], packed["w2"], packed["b2"],
      packed["w5"], packed["b5"], packed["w36"], packed["b36"])
    return out[:B, 0:1], out[:B, 1:2]


def init_double_critic_params(key, state_dim, hidden=HIDDEN):
    """nn.Linear-style init: U(-1/sqrt(fan_in), 1/sqrt(fan_in)).
    Weights are [in, out] (transposed vs. PyTorch's [out, in])."""
    def linear(k, fan_in, fan_out):
        kw, kb = jax.random.split(k)
        bound = 1.0 / np.sqrt(fan_in)
        w = jax.random.uniform(kw, (fan_in, fan_out), jnp.float32, -bound, bound)
        b = jax.random.uniform(kb, (1, fan_out), jnp.float32, -bound, bound)
        return w, b

    keys = jax.random.split(key, 6)
    p = {}
    p["w1"], p["b1"] = linear(keys[0], state_dim, hidden)
    p["w2"], p["b2"] = linear(keys[1], hidden, hidden)
    p["w3"], p["b3"] = linear(keys[2], hidden, 1)
    p["w4"], p["b4"] = linear(keys[3], state_dim, hidden)
    p["w5"], p["b5"] = linear(keys[4], hidden, hidden)
    p["w6"], p["b6"] = linear(keys[5], hidden, 1)
    return p


def pack_double_critic_params(p, weight_dtype=jnp.bfloat16):
    """Pack the per-layer params into the fused layout the kernel consumes.

    Layer 1 of both critics is lane-concatenated; the two output heads become a
    block-diagonal [2*hidden, 2] weight so v1/v2 come out as lanes 0/1 of one matmul.
    Weights cast to bf16 (halves HBM traffic; MXU accumulates f32). Biases stay f32.
    """
    hidden = p["w2"].shape[0]
    w36 = jnp.zeros((2 * hidden, 2), jnp.float32)
    w36 = w36.at[:hidden, 0:1].set(p["w3"]).at[hidden:, 1:2].set(p["w6"])
    return {
        "w14": jnp.concatenate([p["w1"], p["w4"]], axis=1).astype(weight_dtype),
        "b14": jnp.concatenate([p["b1"], p["b4"]], axis=1).astype(jnp.float32),
        "w2": p["w2"].astype(weight_dtype),
        "b2": p["b2"].astype(jnp.float32),
        "w5": p["w5"].astype(weight_dtype),
        "b5": p["b5"].astype(jnp.float32),
        "w36": w36.astype(weight_dtype),
        "b36": jnp.concatenate([p["b3"], p["b6"]], axis=1).astype(jnp.float32),
    }


def double_critic_reference_exact(state, packed):
    """Pure-JAX mirror of the kernel math (same bf16 casts) for a tight check."""
    s = state.astype(jnp.bfloat16)
    h = jnp.dot(s, packed["w14"], preferred_element_type=jnp.float32) + packed["b14"]
    h = jnp.maximum(h, 0.0).astype(jnp.bfloat16)
    h1, h2 = h[:, :HIDDEN], h[:, HIDDEN:]
    g1 = jnp.maximum(
        jnp.dot(h1, packed["w2"], preferred_element_type=jnp.float32) + packed["b2"], 0.0)
    g2 = jnp.maximum(
        jnp.dot(h2, packed["w5"], preferred_element_type=jnp.float32) + packed["b5"], 0.0)
    g = jnp.concatenate([g1, g2], axis=-1).astype(jnp.bfloat16)
    out = jnp.dot(g, packed["w36"], preferred_element_type=jnp.float32) + packed["b36"]
    return out[:, 0:1], out[:, 1:2]


def double_critic_reference_f32(state, p):
    """Original module semantics (f32 Linear->ReLU->Linear->ReLU->Linear, twice)."""
    def mlp(wa, ba, wb, bb, wc, bc):
        h = jnp.maximum(state @ wa + ba, 0.0)
        h = jnp.maximum(h @ wb + bb, 0.0)
        return h @ wc + bc
    return (mlp(p["w1"], p["b1"], p["w2"], p["b2"], p["w3"], p["b3"]),
            mlp(p["w4"], p["b4"], p["w5"], p["b5"], p["w6"], p["b6"]))


if __name__ == "__main__":
    key = jax.random.PRNGKey(0)
    k_params, k_state = jax.random.split(key)

    state_dim = 16
    batch = 20          # deliberately not a multiple of the tile -> exercises padding

    params = init_double_critic_params(k_params, state_dim)
    packed = pack_double_critic_params(params)          # bf16 fused weights
    state = jax.random.normal(k_state, (batch, state_dim), dtype=jnp.float32)

    # Multi-tile path: tile_b=8 -> grid of 3 steps with a zero-padded last tile.
    v1, v2 = double_critic_forward(state, packed, tile_b=8)
    v1 = jax.block_until_ready(v1)
    v2 = jax.block_until_ready(v2)
    assert v1.shape == (batch, 1) and v2.shape == (batch, 1)

    # Default path: tile clamps to the (padded) batch -> single grid step.
    v1d, v2d = double_critic_forward(state, packed)
    jax.block_until_ready(v1d)
    jax.block_until_ready(v2d)

    # Tight check vs. a pure-JAX mirror of the kernel math.
    r1, r2 = double_critic_reference_exact(state, packed)
    np.testing.assert_allclose(np.asarray(v1), np.asarray(r1), rtol=1e-4, atol=1e-4)
    np.testing.assert_allclose(np.asarray(v2), np.asarray(r2), rtol=1e-4, atol=1e-4)
    np.testing.assert_allclose(np.asarray(v1d), np.asarray(r1), rtol=1e-4, atol=1e-4)
    np.testing.assert_allclose(np.asarray(v2d), np.asarray(r2), rtol=1e-4, atol=1e-4)

    # Loose check vs. the original f32 module semantics (only bf16 rounding differs).
    f1, f2 = double_critic_reference_f32(state, params)
    np.testing.assert_allclose(np.asarray(v1), np.asarray(f1), rtol=5e-2, atol=5e-2)
    np.testing.assert_allclose(np.asarray(v2), np.asarray(f2), rtol=5e-2, atol=5e-2)

    print("KERNEL_OK")
</pallas_src>

<mosaic_0001>
module attributes {stable_mosaic.version = 11 : i64} {
  func.func @_double_critic_kernel(%arg0: i32, %arg1: memref<8x16xf32, #tpu.memory_space<vmem>>, %arg2: memref<16x512xbf16, #tpu.memory_space<vmem>>, %arg3: memref<1x512xf32, #tpu.memory_space<vmem>>, %arg4: memref<256x256xbf16, #tpu.memory_space<vmem>>, %arg5: memref<1x256xf32, #tpu.memory_space<vmem>>, %arg6: memref<256x256xbf16, #tpu.memory_space<vmem>>, %arg7: memref<1x256xf32, #tpu.memory_space<vmem>>, %arg8: memref<512x2xbf16, #tpu.memory_space<vmem>>, %arg9: memref<1x2xf32, #tpu.memory_space<vmem>>, %arg10: memref<8x2xf32, #tpu.memory_space<vmem>>) attributes {dimension_semantics = [#tpu.dimension_semantics<parallel>], iteration_bounds = array<i64: 3>, scalar_prefetch = 0 : i64, scratch_operands = 0 : i64, tpu.core_type = #tpu.core_type<tc>, window_params = [{transform_indices = @transform_0, window_bounds = array<i64: 8, 16>}, {pipeline_mode = #tpu.pipeline_mode<synchronous>, transform_indices = @transform_1, window_bounds = array<i64: 16, 512>}, {pipeline_mode = #tpu.pipeline_mode<synchronous>, transform_indices = @transform_2, window_bounds = array<i64: 1, 512>}, {pipeline_mode = #tpu.pipeline_mode<synchronous>, transform_indices = @transform_3, window_bounds = array<i64: 256, 256>}, {pipeline_mode = #tpu.pipeline_mode<synchronous>, transform_indices = @transform_4, window_bounds = array<i64: 1, 256>}, {pipeline_mode = #tpu.pipeline_mode<synchronous>, transform_indices = @transform_5, window_bounds = array<i64: 256, 256>}, {pipeline_mode = #tpu.pipeline_mode<synchronous>, transform_indices = @transform_6, window_bounds = array<i64: 1, 256>}, {pipeline_mode = #tpu.pipeline_mode<synchronous>, transform_indices = @transform_7, window_bounds = array<i64: 512, 2>}, {pipeline_mode = #tpu.pipeline_mode<synchronous>, transform_indices = @transform_8, window_bounds = array<i64: 1, 2>}, {transform_indices = @transform_9, window_bounds = array<i64: 8, 2>}]} {
    %c0 = arith.constant 0 : index
    %c0_0 = arith.constant 0 : index
    %0 = vector.load %arg1[%c0, %c0_0] : memref<8x16xf32, #tpu.memory_space<vmem>>, vector<8x16xf32>
    %1 = arith.truncf %0 : vector<8x16xf32> to vector<8x16xbf16>
    %c0_1 = arith.constant 0 : index
    %c0_2 = arith.constant 0 : index
    %2 = vector.load %arg2[%c0_1, %c0_2] : memref<16x512xbf16, #tpu.memory_space<vmem>>, vector<16x512xbf16>
    %cst = arith.constant dense<0.000000e+00> : vector<8x512xf32>
    %3 = tpu.matmul %1, %2, %cst {dimension_numbers = #tpu.dot_dimension_numbers<[1], [0], [0], [1], [0, 0, 1, 1], [], []>} : vector<8x16xbf16>, vector<16x512xbf16>, vector<8x512xf32> -> vector<8x512xf32>
    %c0_3 = arith.constant 0 : index
    %c0_4 = arith.constant 0 : index
    %4 = vector.load %arg3[%c0_3, %c0_4] : memref<1x512xf32, #tpu.memory_space<vmem>>, vector<1x512xf32>
    %5 = vector.broadcast %4 : vector<1x512xf32> to vector<8x512xf32>
    %6 = arith.addf %3, %5 : vector<8x512xf32>
    %cst_5 = arith.constant 0.000000e+00 : f32
    %7 = vector.broadcast %cst_5 : f32 to vector<8x512xf32>
    %8 = arith.maximumf %6, %7 : vector<8x512xf32>
    %9 = arith.truncf %8 : vector<8x512xf32> to vector<8x512xbf16>
    %10 = vector.extract_strided_slice %9 {offsets = [0, 0], sizes = [8, 256], strides = [1, 1]} : vector<8x512xbf16> to vector<8x256xbf16>
    %11 = vector.extract_strided_slice %9 {offsets = [0, 256], sizes = [8, 256], strides = [1, 1]} : vector<8x512xbf16> to vector<8x256xbf16>
    %c0_6 = arith.constant 0 : index
    %c0_7 = arith.constant 0 : index
    %12 = vector.load %arg4[%c0_6, %c0_7] : memref<256x256xbf16, #tpu.memory_space<vmem>>, vector<256x256xbf16>
    %cst_8 = arith.constant dense<0.000000e+00> : vector<8x256xf32>
    %13 = tpu.matmul %10, %12, %cst_8 {dimension_numbers = #tpu.dot_dimension_numbers<[1], [0], [0], [1], [0, 0, 1, 1], [], []>} : vector<8x256xbf16>, vector<256x256xbf16>, vector<8x256xf32> -> vector<8x256xf32>
    %c0_9 = arith.constant 0 : index
    %c0_10 = arith.constant 0 : index
    %14 = vector.load %arg5[%c0_9, %c0_10] : memref<1x256xf32, #tpu.memory_space<vmem>>, vector<1x256xf32>
    %15 = vector.broadcast %14 : vector<1x256xf32> to vector<8x256xf32>
    %16 = arith.addf %13, %15 : vector<8x256xf32>
    %cst_11 = arith.constant 0.000000e+00 : f32
    %17 = vector.broadcast %cst_11 : f32 to vector<8x256xf32>
    %18 = arith.maximumf %16, %17 : vector<8x256xf32>
    %c0_12 = arith.constant 0 : index
    %c0_13 = arith.constant 0 : index
    %19 = vector.load %arg6[%c0_12, %c0_13] : memref<256x256xbf16, #tpu.memory_space<vmem>>, vector<256x256xbf16>
    %cst_14 = arith.constant dense<0.000000e+00> : vector<8x256xf32>
    %20 = tpu.matmul %11, %19, %cst_14 {dimension_numbers = #tpu.dot_dimension_numbers<[1], [0], [0], [1], [0, 0, 1, 1], [], []>} : vector<8x256xbf16>, vector<256x256xbf16>, vector<8x256xf32> -> vector<8x256xf32>
    %c0_15 = arith.constant 0 : index
    %c0_16 = arith.constant 0 : index
    %21 = vector.load %arg7[%c0_15, %c0_16] : memref<1x256xf32, #tpu.memory_space<vmem>>, vector<1x256xf32>
    %22 = vector.broadcast %21 : vector<1x256xf32> to vector<8x256xf32>
    %23 = arith.addf %20, %22 : vector<8x256xf32>
    %cst_17 = arith.constant 0.000000e+00 : f32
    %24 = vector.broadcast %cst_17 : f32 to vector<8x256xf32>
    %25 = arith.maximumf %23, %24 : vector<8x256xf32>
    %26 = tpu.concatenate %18, %25 in 1 : vector<8x256xf32>, vector<8x256xf32> -> vector<8x512xf32>
    %27 = arith.truncf %26 : vector<8x512xf32> to vector<8x512xbf16>
    %c0_18 = arith.constant 0 : index
    %c0_19 = arith.constant 0 : index
    %28 = vector.load %arg8[%c0_18, %c0_19] : memref<512x2xbf16, #tpu.memory_space<vmem>>, vector<512x2xbf16>
    %cst_20 = arith.constant dense<0.000000e+00> : vector<8x2xf32>
    %29 = tpu.matmul %27, %28, %cst_20 {dimension_numbers = #tpu.dot_dimension_numbers<[1], [0], [0], [1], [0, 0, 1, 1], [], []>} : vector<8x512xbf16>, vector<512x2xbf16>, vector<8x2xf32> -> vector<8x2xf32>
    %c0_21 = arith.constant 0 : index
    %c0_22 = arith.constant 0 : index
    %30 = vector.load %arg9[%c0_21, %c0_22] : memref<1x2xf32, #tpu.memory_space<vmem>>, vector<1x2xf32>
    %31 = vector.broadcast %30 : vector<1x2xf32> to vector<8x2xf32>
    %32 = arith.addf %29, %31 : vector<8x2xf32>
    %c0_23 = arith.constant 0 : index
    %c0_24 = arith.constant 0 : index
    %33 = vector.load %arg10[%c0_23, %c0_24] : memref<8x2xf32, #tpu.memory_space<vmem>>, vector<8x2xf32>
    tpu.vector_store %arg10[%c0_23, %c0_24], %32 {strides = array<i32>} : memref<8x2xf32, #tpu.memory_space<vmem>>, vector<8x2xf32>,
    return
  }
  func.func @transform_0(%arg0: i32) -> (i32, i32) {
    %c0_i32 = arith.constant 0 : i32
    %c0_i32_0 = arith.constant 0 : i32
    return %arg0, %c0_i32 : i32, i32
  }
  func.func @transform_1(%arg0: i32) -> (i32, i32) {
    %c0_i32 = arith.constant 0 : i32
    %c0_i32_0 = arith.constant 0 : i32
    %c0_i32_1 = arith.constant 0 : i32
    return %c0_i32, %c0_i32_0 : i32, i32
  }
  func.func @transform_2(%arg0: i32) -> (i32, i32) {
    %c0_i32 = arith.constant 0 : i32
    %c0_i32_0 = arith.constant 0 : i32
    %c0_i32_1 = arith.constant 0 : i32
    return %c0_i32, %c0_i32_0 : i32, i32
  }
  func.func @transform_3(%arg0: i32) -> (i32, i32) {
    %c0_i32 = arith.constant 0 : i32
    %c0_i32_0 = arith.constant 0 : i32
    %c0_i32_1 = arith.constant 0 : i32
    return %c0_i32, %c0_i32_0 : i32, i32
  }
  func.func @transform_4(%arg0: i32) -> (i32, i32) {
    %c0_i32 = arith.constant 0 : i32
    %c0_i32_0 = arith.constant 0 : i32
    %c0_i32_1 = arith.constant 0 : i32
    return %c0_i32, %c0_i32_0 : i32, i32
  }
  func.func @transform_5(%arg0: i32) -> (i32, i32) {
    %c0_i32 = arith.constant 0 : i32
    %c0_i32_0 = arith.constant 0 : i32
    %c0_i32_1 = arith.constant 0 : i32
    return %c0_i32, %c0_i32_0 : i32, i32
  }
  func.func @transform_6(%arg0: i32) -> (i32, i32) {
    %c0_i32 = arith.constant 0 : i32
    %c0_i32_0 = arith.constant 0 : i32
    %c0_i32_1 = arith.constant 0 : i32
    return %c0_i32, %c0_i32_0 : i32, i32
  }
  func.func @transform_7(%arg0: i32) -> (i32, i32) {
    %c0_i32 = arith.constant 0 : i32
    %c0_i32_0 = arith.constant 0 : i32
    %c0_i32_1 = arith.constant 0 : i32
    return %c0_i32, %c0_i32_0 : i32, i32
  }
  func.func @transform_8(%arg0: i32) -> (i32, i32) {
    %c0_i32 = arith.constant 0 : i32
    %c0_i32_0 = arith.constant 0 : i32
    %c0_i32_1 = arith.constant 0 : i32
    return %c0_i32, %c0_i32_0 : i32, i32
  }
  func.func @transform_9(%arg0: i32) -> (i32, i32) {
    %c0_i32 = arith.constant 0 : i32
    %c0_i32_0 = arith.constant 0 : i32
    return %arg0, %c0_i32 : i32, i32
  }
}

</mosaic_0001>

<llo_original>
// kernel: tpu_custom_call.1
$region0: #{tpu_custom_call.1}
  #allocation0 [shape = 'u32[]', space=smem, size = 0x4, offset = 0x4, fixed_abs, tag = 'smem constant byte address 0x4 - core index']
  #allocation1 [shape = 'u32[144,128]{1,0:T(1,128)}', space=vmem, size = 0x12000, scoped, tag = 'internal scratch']
  %s0 = inlined_call_operand.vmem [shape: f32[24,16], index: 0, kind: input, shape index: {}]
  %s1 = inlined_call_operand.vmem [shape: bf16[16,512], index: 1, kind: input, shape index: {}]
  %s2 = inlined_call_operand.vmem [shape: f32[1,512], index: 2, kind: input, shape index: {}]
  %s3 = inlined_call_operand.vmem [shape: bf16[256,256], index: 3, kind: input, shape index: {}]
  %s4 = inlined_call_operand.vmem [shape: f32[1,256], index: 4, kind: input, shape index: {}]
  %s5 = inlined_call_operand.hbm [shape: bf16[256,256], index: 5, kind: input, shape index: {}]
  %s6 = inlined_call_operand.vmem [shape: f32[1,256], index: 6, kind: input, shape index: {}]
  %s7 = inlined_call_operand.vmem [shape: bf16[512,2], index: 7, kind: input, shape index: {}]
  %s8 = inlined_call_operand.vmem [shape: f32[1,2], index: 8, kind: input, shape index: {}]
  %s9 = inlined_call_operand.vmem [shape: f32[24,2], index: 9, kind: output, shape index: {}]
  %s10 = sld [smem:[#allocation0]]
  $region73: #{tpu_custom_call.1} parent=0
    _
  %s12 = ssub.s32 1, %s10
  %s13 = scalar_select 0, %s12, %s10
  $region1: #{tpu_custom_call.1} parent=0
    #allocation2 [shape = 'u8[131072]{0}', space=vmem, size = 0x20000, scoped, tag = 'input window, operand 5, single buffered']
    #allocation3 [shape = 's32[2]{0}', space=sflag, size = 0x8, scoped, tag = 'scoped memory for tpu_custom_call.1']
    %14 = vsyncpa [#allocation3], 0
    loop: start=0, step=1, limit=5
    $region2: #{tpu_custom_call.1} parent=1 // loop_pre_header
      _
    $region3: #{tpu_custom_call.1} parent=1 // loop_header
      %s16 = sphi 0, %s20
      %p17 = scmp.ge.s32.totalorder %s16, 5
      %s26 = sphi 0, %s28
      %s29 = sphi 0, %s26
      %s30 = sphi 0, %s29
      %s46 = sphi 0, %s30
      %s50 = sphi 0, %s50
      %s52 = sphi 0, %s50
      %s53 = sphi 0, %s52
      %s67 = sphi 0, %s53
      %s71 = sphi 0, %s71
      %s73 = sphi 0, %s71
      %s74 = sphi 0, %s73
      %s88 = sphi 0, %s74
      %s92 = sphi 0, %s92
      %s94 = sphi 0, %s92
      %s95 = sphi 0, %s94
      %s109 = sphi 0, %s95
      %s113 = sphi 0, %s113
      %s115 = sphi 0, %s113
      %s116 = sphi 0, %s115
      %s130 = sphi 0, %s116
      %s134 = sphi 0, %s134
      %s136 = sphi 0, %s134
      %s137 = sphi 0, %s136
      %s151 = sphi 0, %s137
      %s155 = sphi 0, %s155
      %s157 = sphi 0, %s155
      %s158 = sphi 0, %s157
      %s172 = sphi 0, %s158
      %s176 = sphi 0, %s176
      %s178 = sphi 0, %s176
      %s179 = sphi 0, %s178
      %s193 = sphi 0, %s179
      %s197 = sphi 0, %s197
      %s199 = sphi 0, %s197
      %s200 = sphi 0, %s199
      %s214 = sphi 0, %s200
      %s220 = sphi 0, %s222
      %s223 = sphi 0, %s220
      %s224 = sphi 0, %s223
      %s240 = sphi 0, %s224
    $region4: #{tpu_custom_call.1} parent=1 // loop_header_branch
      %19 = sbr.rel (%p17) target = $region8
    $region5: #{tpu_custom_call.1} parent=1 // loop_body
      %s21 = ssub.s32 %s16, 1
      %s22 = ssub.s32 %s16, 2
      %s23 = sadd.s32 %s16, 1
      %s24 = ssub.s32 %s16, %s23
      %p25 = scmp.eq.s32.totalorder %s24, 0
      %s27 = sadd.s32 %s26, 1
      %s28 = scalar_select %p25, %s26, %s27
      %p31 = pneg %p25
      %p32 = scmp.eq.s32.totalorder %s16, 2
      %p33 = por %p31, %p32
      %p34 = scmp.ne.s32.totalorder %s26, %s29
      %p35 = scmp.eq.s32.totalorder %s16, 0
      %p36 = por %p34, %p35
      %p37 = scmp.ne.s32.totalorder %s26, %s29
      %p38 = scmp.eq.s32.totalorder %s21, 2
      %p39 = por %p37, %p38
      %p40 = scmp.ne.s32.totalorder %s29, %s30
      %p41 = scmp.eq.s32.totalorder %s21, 0
      %p42 = por %p40, %p41
      %p43 = scmp.ne.s32.totalorder %s29, %s30
      %p44 = scmp.eq.s32.totalorder %s22, 2
      %p45 = por %p43, %p44
      %p47 = scmp.ne.s32.totalorder %s30, %s46
      %p48 = scmp.eq.s32.totalorder %s22, 0
      %p49 = por %p47, %p48
      %s51 = sadd.s32 %s50, 1
      %p54 = scmp.eq.s32.totalorder %s16, 2
      %p55 = scmp.ne.s32.totalorder %s50, %s52
      %p56 = scmp.eq.s32.totalorder %s16, 0
      %p57 = por %p55, %p56
      %p58 = scmp.ne.s32.totalorder %s50, %s52
      %p59 = scmp.eq.s32.totalorder %s21, 2
      %p60 = por %p58, %p59
      %p61 = scmp.ne.s32.totalorder %s52, %s53
      %p62 = scmp.eq.s32.totalorder %s21, 0
      %p63 = por %p61, %p62
      %p64 = scmp.ne.s32.totalorder %s52, %s53
      %p65 = scmp.eq.s32.totalorder %s22, 2
      %p66 = por %p64, %p65
      %p68 = scmp.ne.s32.totalorder %s53, %s67
      %p69 = scmp.eq.s32.totalorder %s22, 0
      %p70 = por %p68, %p69
      %s72 = sadd.s32 %s71, 1
      %p75 = scmp.eq.s32.totalorder %s16, 2
      %p76 = scmp.ne.s32.totalorder %s71, %s73
      %p77 = scmp.eq.s32.totalorder %s16, 0
      %p78 = por %p76, %p77
      %p79 = scmp.ne.s32.totalorder %s71, %s73
      %p80 = scmp.eq.s32.totalorder %s21, 2
      %p81 = por %p79, %p80
      %p82 = scmp.ne.s32.totalorder %s73, %s74
      %p83 = scmp.eq.s32.totalorder %s21, 0
      %p84 = por %p82, %p83
      %p85 = scmp.ne.s32.totalorder %s73, %s74
      %p86 = scmp.eq.s32.totalorder %s22, 2
      %p87 = por %p85, %p86
      %p89 = scmp.ne.s32.totalorder %s74, %s88
      %p90 = scmp.eq.s32.totalorder %s22, 0
      %p91 = por %p89, %p90
      %s93 = sadd.s32 %s92, 1
      %p96 = scmp.eq.s32.totalorder %s16, 2
      %p97 = scmp.ne.s32.totalorder %s92, %s94
      %p98 = scmp.eq.s32.totalorder %s16, 0
      %p99 = por %p97, %p98
      %p100 = scmp.ne.s32.totalorder %s92, %s94
      %p101 = scmp.eq.s32.totalorder %s21, 2
      %p102 = por %p100, %p101
      %p103 = scmp.ne.s32.totalorder %s94, %s95
      %p104 = scmp.eq.s32.totalorder %s21, 0
      %p105 = por %p103, %p104
      %p106 = scmp.ne.s32.totalorder %s94, %s95
      %p107 = scmp.eq.s32.totalorder %s22, 2
      %p108 = por %p106, %p107
      %p110 = scmp.ne.s32.totalorder %s95, %s109
      %p111 = scmp.eq.s32.totalorder %s22, 0
      %p112 = por %p110, %p111
      %s114 = sadd.s32 %s113, 1
      %p117 = scmp.eq.s32.totalorder %s16, 2
      %p118 = scmp.ne.s32.totalorder %s113, %s115
      %p119 = scmp.eq.s32.totalorder %s16, 0
      %p120 = por %p118, %p119
      %p121 = scmp.ne.s32.totalorder %s113, %s115
      %p122 = scmp.eq.s32.totalorder %s21, 2
      %p123 = por %p121, %p122
      %p124 = scmp.ne.s32.totalorder %s115, %s116
      %p125 = scmp.eq.s32.totalorder %s21, 0
      %p126 = por %p124, %p125
      %p127 = scmp.ne.s32.totalorder %s115, %s116
      %p128 = scmp.eq.s32.totalorder %s22, 2
      %p129 = por %p127, %p128
      %p131 = scmp.ne.s32.totalorder %s116, %s130
      %p132 = scmp.eq.s32.totalorder %s22, 0
      %p133 = por %p131, %p132
      %s135 = sadd.s32 %s134, 1
      %p138 = scmp.eq.s32.totalorder %s16, 2
      %p139 = scmp.ne.s32.totalorder %s134, %s136
      %p140 = scmp.eq.s32.totalorder %s16, 0
      %p141 = por %p139, %p140
      %p142 = scmp.ne.s32.totalorder %s134, %s136
      %p143 = scmp.eq.s32.totalorder %s21, 2
      %p144 = por %p142, %p143
      %p145 = scmp.ne.s32.totalorder %s136, %s137
      %p146 = scmp.eq.s32.totalorder %s21, 0
      %p147 = por %p145, %p146
      %p148 = scmp.ne.s32.totalorder %s136, %s137
      %p149 = scmp.eq.s32.totalorder %s22, 2
      %p150 = por %p148, %p149
      %p152 = scmp.ne.s32.totalorder %s137, %s151
      %p153 = scmp.eq.s32.totalorder %s22, 0
      %p154 = por %p152, %p153
      %s156 = sadd.s32 %s155, 1
      %p159 = scmp.eq.s32.totalorder %s16, 2
      %p160 = scmp.ne.s32.totalorder %s155, %s157
      %p161 = scmp.eq.s32.totalorder %s16, 0
      %p162 = por %p160, %p161
      %p163 = scmp.ne.s32.totalorder %s155, %s157
      %p164 = scmp.eq.s32.totalorder %s21, 2
      %p165 = por %p163, %p164
      %p166 = scmp.ne.s32.totalorder %s157, %s158
      %p167 = scmp.eq.s32.totalorder %s21, 0
      %p168 = por %p166, %p167
      %p169 = scmp.ne.s32.totalorder %s157, %s158
      %p170 = scmp.eq.s32.totalorder %s22, 2
      %p171 = por %p169, %p170
      %p173 = scmp.ne.s32.totalorder %s158, %s172
      %p174 = scmp.eq.s32.totalorder %s22, 0
      %p175 = por %p173, %p174
      %s177 = sadd.s32 %s176, 1
      %p180 = scmp.eq.s32.totalorder %s16, 2
      %p181 = scmp.ne.s32.totalorder %s176, %s178
      %p182 = scmp.eq.s32.totalorder %s16, 0
      %p183 = por %p181, %p182
      %p184 = scmp.ne.s32.totalorder %s176, %s178
      %p185 = scmp.eq.s32.totalorder %s21, 2
      %p186 = por %p184, %p185
      %p187 = scmp.ne.s32.totalorder %s178, %s179
      %p188 = scmp.eq.s32.totalorder %s21, 0
      %p189 = por %p187, %p188
      %p190 = scmp.ne.s32.totalorder %s178, %s179
      %p191 = scmp.eq.s32.totalorder %s22, 2
      %p192 = por %p190, %p191
      %p194 = scmp.ne.s32.totalorder %s179, %s193
      %p195 = scmp.eq.s32.totalorder %s22, 0
      %p196 = por %p194, %p195
      %s198 = sadd.s32 %s197, 1
      %p201 = scmp.eq.s32.totalorder %s16, 2
      %p202 = scmp.ne.s32.totalorder %s197, %s199
      %p203 = scmp.eq.s32.totalorder %s16, 0
      %p204 = por %p202, %p203
      %p205 = scmp.ne.s32.totalorder %s197, %s199
      %p206 = scmp.eq.s32.totalorder %s21, 2
      %p207 = por %p205, %p206
      %p208 = scmp.ne.s32.totalorder %s199, %s200
      %p209 = scmp.eq.s32.totalorder %s21, 0
      %p210 = por %p208, %p209
      %p211 = scmp.ne.s32.totalorder %s199, %s200
      %p212 = scmp.eq.s32.totalorder %s22, 2
      %p213 = por %p211, %p212
      %p215 = scmp.ne.s32.totalorder %s200, %s214
      %p216 = scmp.eq.s32.totalorder %s22, 0
      %p217 = por %p215, %p216
      %s218 = ssub.s32 %s16, %s23
      %p219 = scmp.eq.s32.totalorder %s218, 0
      %s221 = sadd.s32 %s220, 1
      %s222 = scalar_select %p219, %s220, %s221
      %p225 = pneg %p219
      %p226 = scmp.eq.s32.totalorder %s16, 2
      %p227 = por %p225, %p226
      %p228 = scmp.ne.s32.totalorder %s220, %s223
      %p229 = scmp.eq.s32.totalorder %s16, 0
      %p230 = por %p228, %p229
      %p231 = scmp.ne.s32.totalorder %s220, %s223
      %p232 = scmp.eq.s32.totalorder %s21, 2
      %p233 = por %p231, %p232
      %p234 = scmp.ne.s32.totalorder %s223, %s224
      %p235 = scmp.eq.s32.totalorder %s21, 0
      %p236 = por %p234, %p235
      %p237 = scmp.ne.s32.totalorder %s223, %s224
      %p238 = scmp.eq.s32.totalorder %s22, 2
      %p239 = por %p237, %p238
      %p241 = scmp.ne.s32.totalorder %s224, %s240
      %p242 = scmp.eq.s32.totalorder %s22, 0
      %p243 = por %p241, %p242
      %p244 = scmp.le.s32.totalorder 1, %s16
      %p245 = scmp.lt.s32.totalorder %s16, 4
      %p246 = pnand %p244, %p245
      %p247 = pneg %p246
      // Predicated region
      $region9: #{tpu_custom_call.1} parent=5 // pred_check
        _
      $region10: #{tpu_custom_call.1} parent=5 // pred_check_branch
        %249 = sbr.rel (%p246) target = $region12
      $region11: #{tpu_custom_call.1} parent=5 // pred_region
        %s250 = ssub.s32 %s16, 1
        // Predicated region
        $region13: #{tpu_custom_call.1} parent=11 // pred_check
          %p251 = pneg %p63
        $region14: #{tpu_custom_call.1} parent=11 // pred_check_branch
          %253 = sbr.rel (%p251) target = $region16
        $region15: #{tpu_custom_call.1} parent=11 // pred_region
          _
        $region16: #{tpu_custom_call.1} parent=11 // pred_fallthru
          _
        // Predicated region
        $region17: #{tpu_custom_call.1} parent=11 // pred_check
          %p254 = pneg %p84
        $region18: #{tpu_custom_call.1} parent=11 // pred_check_branch
          %256 = sbr.rel (%p254) target = $region20
        $region19: #{tpu_custom_call.1} parent=11 // pred_region
          _
        $region20: #{tpu_custom_call.1} parent=11 // pred_fallthru
          _
        // Predicated region
        $region21: #{tpu_custom_call.1} parent=11 // pred_check
          %p257 = pneg %p105
        $region22: #{tpu_custom_call.1} parent=11 // pred_check_branch
          %259 = sbr.rel (%p257) target = $region24
        $region23: #{tpu_custom_call.1} parent=11 // pred_region
          _
        $region24: #{tpu_custom_call.1} parent=11 // pred_fallthru
          _
        // Predicated region
        $region25: #{tpu_custom_call.1} parent=11 // pred_check
          %p260 = pneg %p126
        $region26: #{tpu_custom_call.1} parent=11 // pred_check_branch
          %262 = sbr.rel (%p260) target = $region28
        $region27: #{tpu_custom_call.1} parent=11 // pred_region
          _
        $region28: #{tpu_custom_call.1} parent=11 // pred_fallthru
          _
        // Predicated region
        $region29: #{tpu_custom_call.1} parent=11 // pred_check
          %p263 = pneg %p147
        $region30: #{tpu_custom_call.1} parent=11 // pred_check_branch
          %265 = sbr.rel (%p263) target = $region32
        $region31: #{tpu_custom_call.1} parent=11 // pred_region
          %s267 = ssub.s32 4096, 4096
          %268 = vsyncadd [#allocation3], %s267
          %s269 = sshll.u32 [#allocation2], 4
          %s270 = int_to_ptr.vmem [resolvable:$true] %s269
          %275 = dma.hbm_to_vmem [thread:$0]  %s5, 4096, %s270, [#allocation3], 128, 128, 8
        $region32: #{tpu_custom_call.1} parent=11 // pred_fallthru
          _
        // Predicated region
        $region33: #{tpu_custom_call.1} parent=11 // pred_check
          %p276 = pneg %p168
        $region34: #{tpu_custom_call.1} parent=11 // pred_check_branch
          %278 = sbr.rel (%p276) target = $region36
        $region35: #{tpu_custom_call.1} parent=11 // pred_region
          _
        $region36: #{tpu_custom_call.1} parent=11 // pred_fallthru
          _
        // Predicated region
        $region37: #{tpu_custom_call.1} parent=11 // pred_check
          %p279 = pneg %p189
        $region38: #{tpu_custom_call.1} parent=11 // pred_check_branch
          %281 = sbr.rel (%p279) target = $region40
        $region39: #{tpu_custom_call.1} parent=11 // pred_region
          _
        $region40: #{tpu_custom_call.1} parent=11 // pred_fallthru
          _
        // Predicated region
        $region41: #{tpu_custom_call.1} parent=11 // pred_check
          %p282 = pneg %p210
        $region42: #{tpu_custom_call.1} parent=11 // pred_check_branch
          %284 = sbr.rel (%p282) target = $region44
        $region43: #{tpu_custom_call.1} parent=11 // pred_region
          _
        $region44: #{tpu_custom_call.1} parent=11 // pred_fallthru
          _
      $region12: #{tpu_custom_call.1} parent=5 // pred_fallthru
        _
      %p285 = scmp.lt.s32.totalorder %s16, 3
      // Predicated region
      $region45: #{tpu_custom_call.1} parent=5 // pred_check
        %p286 = pneg %p285
      $region46: #{tpu_custom_call.1} parent=5 // pred_check_branch
        %288 = sbr.rel (%p286) target = $region48
      $region47: #{tpu_custom_call.1} parent=5 // pred_region
        // Predicated region
        $region49: #{tpu_custom_call.1} parent=47 // pred_check
          %p289 = pneg %p36
        $region50: #{tpu_custom_call.1} parent=47 // pred_check_branch
          %291 = sbr.rel (%p289) target = $region52
        $region51: #{tpu_custom_call.1} parent=47 // pred_region
          %p292 = scmp.lt.s32.totalorder %s16, 2
          %s293 = scalar_select %p292, %s16, 2
          %s294 = smul.addr %s293, 8
          %s295 = scalar_lea.vmem %s0, %s294
        $region52: #{tpu_custom_call.1} parent=47 // pred_fallthru
          _
      $region48: #{tpu_custom_call.1} parent=5 // pred_fallthru
        _
      %p296 = scmp.le.s32.totalorder 1, %s16
      %p297 = scmp.lt.s32.totalorder %s16, 4
      %p298 = pnand %p296, %p297
      %p299 = pneg %p298
      // Predicated region
      $region53: #{tpu_custom_call.1} parent=5 // pred_check
        _
      $region54: #{tpu_custom_call.1} parent=5 // pred_check_branch
        %301 = sbr.rel (%p298) target = $region56
      $region55: #{tpu_custom_call.1} parent=5 // pred_region
        %s302 = ssub.s32 %s16, 1
        // Predicated region
        $region57: #{tpu_custom_call.1} parent=55 // pred_check
          %p303 = pneg %p147
        $region58: #{tpu_custom_call.1} parent=55 // pred_check_branch
          %305 = sbr.rel (%p303) target = $region60
        $region59: #{tpu_custom_call.1} parent=55 // pred_region
          %306 = dma.done [#allocation3], 4096
        $region60: #{tpu_custom_call.1} parent=55 // pred_fallthru
          _
        %p307 = scmp.lt.s32.totalorder %s21, 2
        %s308 = scalar_select %p307, %s21, 2
        %s309 = smul.addr %s308, 8
        %s310 = scalar_lea.vmem %s0, %s309
        %p311 = pneg %p42
        %p312 = pneg %p39
        %p313 = pneg %p63
        %p314 = pneg %p60
        %p315 = pneg %p84
        %p316 = pneg %p81
        %p317 = pneg %p105
        %p318 = pneg %p102
        %p319 = pneg %p126
        %p320 = pneg %p123
        %p321 = pneg %p147
        %p322 = pneg %p144
        %p323 = pneg %p168
        %p324 = pneg %p165
        %p325 = pneg %p189
        %p326 = pneg %p186
        %p327 = pneg %p210
        %p328 = pneg %p207
        %p329 = pneg %p236
        %p330 = pneg %p233
        %p331 = scmp.lt.s32.totalorder %s21, 2
        %s332 = scalar_select %p331, %s21, 2
        %s333 = smul.addr %s332, 8
        %s334 = scalar_lea.vmem %s9, %s333
        %p335 = scmp.lt.s32.totalorder %s21, 2
        %s336 = scalar_select %p335, %s21, 2
        %s337 = smul.addr %s336, 8
        %s338 = scalar_lea.vmem %s0, %s337
        %p339 = scmp.lt.s32.totalorder %s21, 2
        %s340 = scalar_select %p339, %s21, 2
        %s341 = smul.addr %s340, 8
        %s342 = scalar_lea.vmem %s9, %s341
        %v344 = vld [vmem:[%s338] sm:$0xff]
        %v345 = vpack.c.bf16 %v344, %v344
        %v346 = vld [vmem:[%s1] sm:$0xff]
        %v347 = vld [vmem:[%s1 + $0x8] sm:$0xff]
        %v348 = vld [vmem:[%s1 + $0x10] sm:$0xff]
        %v349 = vld [vmem:[%s1 + $0x18] sm:$0xff]
        %v350 = vld [vmem:[%s2] sm:$0xf]
        %v352 = vlaneseq
        %v353 = vshrl.u32 %v352, 7
        %v354 = vsub.s32 0, %v353
        %v355 = vrot.slane %v350, %v354
        %v356 = vlaneseq
        %v357 = vshrl.u32 %v356, 7
        %v358 = vsub.s32 1, %v357
        %v359 = vrot.slane %v350, %v358
        %v360 = vlaneseq
        %v361 = vshrl.u32 %v360, 7
        %v362 = vsub.s32 2, %v361
        %v363 = vrot.slane %v350, %v362
        %v364 = vlaneseq
        %v365 = vshrl.u32 %v364, 7
        %v366 = vsub.s32 3, %v365
        %v367 = vrot.slane %v350, %v366
        %v376 = vunpack.c.l.b16 %v346
        %v377 = vunpack.c.h.b16 %v346
        %v378 = vunpack.c.l.b16 %v347
        %v379 = vunpack.c.h.b16 %v347
        %v380 = vunpack.c.l.b16 %v348
        %v381 = vunpack.c.h.b16 %v348
        %v382 = vunpack.c.l.b16 %v349
        %v383 = vunpack.c.h.b16 %v349
        %v384 = vpack.c.b16 %v380, %v376
        %v385 = vpack.c.b16 %v381, %v377
        %v386 = vpack.c.b16 %v382, %v378
        %v387 = vpack.c.b16 %v383, %v379
        %vm392 = vcmask 130048
        %v394 = vsel %vm392, %v345, 0
        %396 = vmatprep.subr.bf16.mxu0 %v385
        %397 = vmatpush1.bf16.msra.mxu0 %v384
        %398 = vmatprep.subr.bf16.mxu0 0
        %399 = vmatpush1.bf16.msra.mxu0 0
        %400 = vmatprep.subr.bf16.mxu0 0
        %401 = vmatpush1.bf16.msra.mxu0 0
        %402 = vmatprep.subr.bf16.mxu0 0
        %403 = vmatpush1.bf16.msra.mxu0 0
        %404 = vmatprep.subr.bf16.mxu0 0
        %405 = vmatpush1.bf16.msra.mxu0 0
        %406 = vmatprep.subr.bf16.mxu0 0
        %407 = vmatpush1.bf16.msra.mxu0 0
        %408 = vmatprep.subr.bf16.mxu0 0
        %409 = vmatpush1.bf16.msra.mxu0 0
        %410 = vmatprep.subr.bf16.mxu0 0
        %411 = vmatpush1.bf16.msra.mxu0 0
        %412 = vmatprep.subr.bf16.mxu0 0
        %413 = vmatpush1.bf16.msra.mxu0 0
        %414 = vmatprep.subr.bf16.mxu0 0
        %415 = vmatpush1.bf16.msra.mxu0 0
        %416 = vmatprep.subr.bf16.mxu0 0
        %417 = vmatpush1.bf16.msra.mxu0 0
        %418 = vmatprep.subr.bf16.mxu0 0
        %419 = vmatpush1.bf16.msra.mxu0 0
        %420 = vmatprep.subr.bf16.mxu0 0
        %421 = vmatpush1.bf16.msra.mxu0 0
        %422 = vmatprep.subr.bf16.mxu0 0
        %423 = vmatpush1.bf16.msra.mxu0 0
        %424 = vmatprep.subr.bf16.mxu0 0
        %425 = vmatpush1.bf16.msra.mxu0 0
        %426 = vmatprep.subr.bf16.mxu0 0
        %427 = vmatpush1.bf16.msra.mxu0 0
        %428 = vmatprep.mubr.bf16.mxu0 0
        %429 = vmatmul.mubr.bf16.gmra.mrb[0].mxu0 %v394
        %v430 = vpop.f32.mrb[0].mxu0
        %v431 = vadd.f32 %v355, %v430
        %v432 = vpop.f32.mrb[0].mxu0
        %v433 = vadd.f32 %v359, %v432
        %v434 = vpop.f32.mrb[0].mxu0
        %v435 = vpop.f32.mrb[0].mxu0
        %436 = vdwg.mxu0
        %437 = vmatprep.subr.bf16.mxu0 %v387
        %438 = vmatpush1.bf16.msra.mxu0 %v386
        %439 = vmatprep.subr.bf16.mxu0 0
        %440 = vmatpush1.bf16.msra.mxu0 0
        %441 = vmatprep.subr.bf16.mxu0 0
        %442 = vmatpush1.bf16.msra.mxu0 0
        %443 = vmatprep.subr.bf16.mxu0 0
        %444 = vmatpush1.bf16.msra.mxu0 0
        %445 = vmatprep.subr.bf16.mxu0 0
        %446 = vmatpush1.bf16.msra.mxu0 0
        %447 = vmatprep.subr.bf16.mxu0 0
        %448 = vmatpush1.bf16.msra.mxu0 0
        %449 = vmatprep.subr.bf16.mxu0 0
        %450 = vmatpush1.bf16.msra.mxu0 0
        %451 = vmatprep.subr.bf16.mxu0 0
        %452 = vmatpush1.bf16.msra.mxu0 0
        %453 = vmatprep.subr.bf16.mxu0 0
        %454 = vmatpush1.bf16.msra.mxu0 0
        %455 = vmatprep.subr.bf16.mxu0 0
        %456 = vmatpush1.bf16.msra.mxu0 0
        %457 = vmatprep.subr.bf16.mxu0 0
        %458 = vmatpush1.bf16.msra.mxu0 0
        %459 = vmatprep.subr.bf16.mxu0 0
        %460 = vmatpush1.bf16.msra.mxu0 0
        %461 = vmatprep.subr.bf16.mxu0 0
        %462 = vmatpush1.bf16.msra.mxu0 0
        %463 = vmatprep.subr.bf16.mxu0 0
        %464 = vmatpush1.bf16.msra.mxu0 0
        %465 = vmatprep.subr.bf16.mxu0 0
        %466 = vmatpush1.bf16.msra.mxu0 0
        %467 = vmatprep.subr.bf16.mxu0 0
        %468 = vmatpush1.bf16.msra.mxu0 0
        %469 = vmatprep.mubr.bf16.mxu0 0
        %470 = vmatmul.mubr.bf16.gmra.mrb[0].mxu0 %v394
        %v471 = vpop.f32.mrb[0].mxu0
        %v472 = vadd.f32 %v363, %v471
        %v473 = vpop.f32.mrb[0].mxu0
        %v474 = vadd.f32 %v367, %v473
        %v475 = vpop.f32.mrb[0].mxu0
        %v476 = vpop.f32.mrb[0].mxu0
        %477 = vdwg.mxu0
        %v478 = vmax.f32 %v431, 0.0
        %v479 = vmax.f32 %v433, 0.0
        %v480 = vmax.f32 %v472, 0.0
        %v481 = vmax.f32 %v474, 0.0
        %v482 = vpack.c.bf16 %v478, %v478
        %v483 = vpack.c.bf16 %v479, %v479
        %v484 = vpack.c.bf16 %v480, %v480
        %v485 = vpack.c.bf16 %v481, %v481
        %v486 = vld [vmem:[%s3] sm:$0xff]
        %v487 = vld [vmem:[%s3 + $0x8] sm:$0xff]
        %v488 = vld [vmem:[%s3 + $0x10] sm:$0xff]
        %v489 = vld [vmem:[%s3 + $0x18] sm:$0xff]
        %v490 = vld [vmem:[%s3 + $0x20] sm:$0xff]
        %v491 = vld [vmem:[%s3 + $0x28] sm:$0xff]
        %v492 = vld [vmem:[%s3 + $0x30] sm:$0xff]
        %v493 = vld [vmem:[%s3 + $0x38] sm:$0xff]
        %v494 = vld [vmem:[%s3 + $0x40] sm:$0xff]
        %v495 = vld [vmem:[%s3 + $0x48] sm:$0xff]
        %v496 = vld [vmem:[%s3 + $0x50] sm:$0xff]
        %v497 = vld [vmem:[%s3 + $0x58] sm:$0xff]
        %v498 = vld [vmem:[%s3 + $0x60] sm:$0xff]
        %v499 = vld [vmem:[%s3 + $0x68] sm:$0xff]
        %v500 = vld [vmem:[%s3 + $0x70] sm:$0xff]
        %v501 = vld [vmem:[%s3 + $0x78] sm:$0xff]
        %v502 = vld [vmem:[%s3 + $0x80] sm:$0xff]
        %v503 = vld [vmem:[%s3 + $0x88] sm:$0xff]
        %v504 = vld [vmem:[%s3 + $0x90] sm:$0xff]
        %v505 = vld [vmem:[%s3 + $0x98] sm:$0xff]
        %v506 = vld [vmem:[%s3 + $0xa0] sm:$0xff]
        %v507 = vld [vmem:[%s3 + $0xa8] sm:$0xff]
        %v508 = vld [vmem:[%s3 + $0xb0] sm:$0xff]
        %v509 = vld [vmem:[%s3 + $0xb8] sm:$0xff]
        %v510 = vld [vmem:[%s3 + $0xc0] sm:$0xff]
        %v511 = vld [vmem:[%s3 + $0xc8] sm:$0xff]
        %v512 = vld [vmem:[%s3 + $0xd0] sm:$0xff]
        %v513 = vld [vmem:[%s3 + $0xd8] sm:$0xff]
        %v514 = vld [vmem:[%s3 + $0xe0] sm:$0xff]
        %v515 = vld [vmem:[%s3 + $0xe8] sm:$0xff]
        %v516 = vld [vmem:[%s3 + $0xf0] sm:$0xff]
        %v517 = vld [vmem:[%s3 + $0xf8] sm:$0xff]
        %v518 = vld [vmem:[%s4] sm:$0x3]
        %v520 = vlaneseq
        %v521 = vshrl.u32 %v520, 7
        %v522 = vsub.s32 0, %v521
        %v523 = vrot.slane %v518, %v522
        %v524 = vlaneseq
        %v525 = vshrl.u32 %v524, 7
        %v526 = vsub.s32 1, %v525
        %v527 = vrot.slane %v518, %v526
        %v562 = vunpack.c.l.b16 %v486
        %v563 = vunpack.c.h.b16 %v486
        %v564 = vunpack.c.l.b16 %v487
        %v565 = vunpack.c.h.b16 %v487
        %v566 = vunpack.c.l.b16 %v488
        %v567 = vunpack.c.h.b16 %v488
        %v568 = vunpack.c.l.b16 %v489
        %v569 = vunpack.c.h.b16 %v489
        %v570 = vunpack.c.l.b16 %v490
        %v571 = vunpack.c.h.b16 %v490
        %v572 = vunpack.c.l.b16 %v491
        %v573 = vunpack.c.h.b16 %v491
        %v574 = vunpack.c.l.b16 %v492
        %v575 = vunpack.c.h.b16 %v492
        %v576 = vunpack.c.l.b16 %v493
        %v577 = vunpack.c.h.b16 %v493
        %v578 = vunpack.c.l.b16 %v494
        %v579 = vunpack.c.h.b16 %v494
        %v580 = vunpack.c.l.b16 %v495
        %v581 = vunpack.c.h.b16 %v495
        %v582 = vunpack.c.l.b16 %v496
        %v583 = vunpack.c.h.b16 %v496
        %v584 = vunpack.c.l.b16 %v497
        %v585 = vunpack.c.h.b16 %v497
        %v586 = vunpack.c.l.b16 %v498
        %v587 = vunpack.c.h.b16 %v498
        %v588 = vunpack.c.l.b16 %v499
        %v589 = vunpack.c.h.b16 %v499
        %v590 = vunpack.c.l.b16 %v500
        %v591 = vunpack.c.h.b16 %v500
        %v592 = vunpack.c.l.b16 %v501
        %v593 = vunpack.c.h.b16 %v501
        %v594 = vunpack.c.l.b16 %v502
        %v595 = vunpack.c.h.b16 %v502
        %v596 = vunpack.c.l.b16 %v503
        %v597 = vunpack.c.h.b16 %v503
        %v598 = vunpack.c.l.b16 %v504
        %v599 = vunpack.c.h.b16 %v504
        %v600 = vunpack.c.l.b16 %v505
        %v601 = vunpack.c.h.b16 %v505
        %v602 = vunpack.c.l.b16 %v506
        %v603 = vunpack.c.h.b16 %v506
        %v604 = vunpack.c.l.b16 %v507
        %v605 = vunpack.c.h.b16 %v507
        %v606 = vunpack.c.l.b16 %v508
        %v607 = vunpack.c.h.b16 %v508
        %v608 = vunpack.c.l.b16 %v509
        %v609 = vunpack.c.h.b16 %v509
        %v610 = vunpack.c.l.b16 %v510
        %v611 = vunpack.c.h.b16 %v510
        %v612 = vunpack.c.l.b16 %v511
        %v613 = vunpack.c.h.b16 %v511
        %v614 = vunpack.c.l.b16 %v512
        %v615 = vunpack.c.h.b16 %v512
        %v616 = vunpack.c.l.b16 %v513
        %v617 = vunpack.c.h.b16 %v513
        %v618 = vunpack.c.l.b16 %v514
        %v619 = vunpack.c.h.b16 %v514
        %v620 = vunpack.c.l.b16 %v515
        %v621 = vunpack.c.h.b16 %v515
        %v622 = vunpack.c.l.b16 %v516
        %v623 = vunpack.c.h.b16 %v516
        %v624 = vunpack.c.l.b16 %v517
        %v625 = vunpack.c.h.b16 %v517
        %v626 = vpack.c.b16 %v564, %v562
        %v627 = vpack.c.b16 %v565, %v563
        %v628 = vpack.c.b16 %v568, %v566
        %v629 = vpack.c.b16 %v569, %v567
        %v630 = vpack.c.b16 %v572, %v570
        %v631 = vpack.c.b16 %v573, %v571
        %v632 = vpack.c.b16 %v576, %v574
        %v633 = vpack.c.b16 %v577, %v575
        %v634 = vpack.c.b16 %v580, %v578
        %v635 = vpack.c.b16 %v581, %v579
        %v636 = vpack.c.b16 %v584, %v582
        %v637 = vpack.c.b16 %v585, %v583
        %v638 = vpack.c.b16 %v588, %v586
        %v639 = vpack.c.b16 %v589, %v587
        %v640 = vpack.c.b16 %v592, %v590
        %v641 = vpack.c.b16 %v593, %v591
        %v642 = vpack.c.b16 %v596, %v594
        %v643 = vpack.c.b16 %v597, %v595
        %v644 = vpack.c.b16 %v600, %v598
        %v645 = vpack.c.b16 %v601, %v599
        %v646 = vpack.c.b16 %v604, %v602
        %v647 = vpack.c.b16 %v605, %v603
        %v648 = vpack.c.b16 %v608, %v606
        %v649 = vpack.c.b16 %v609, %v607
        %v650 = vpack.c.b16 %v612, %v610
        %v651 = vpack.c.b16 %v613, %v611
        %v652 = vpack.c.b16 %v616, %v614
        %v653 = vpack.c.b16 %v617, %v615
        %v654 = vpack.c.b16 %v620, %v618
        %v655 = vpack.c.b16 %v621, %v619
        %v656 = vpack.c.b16 %v624, %v622
        %v657 = vpack.c.b16 %v625, %v623
        %690 = vmatprep.subr.bf16.mxu0 %v627
        %691 = vmatpush1.bf16.msra.mxu0 %v626
        %692 = vmatprep.subr.bf16.mxu0 %v629
        %693 = vmatpush1.bf16.msra.mxu0 %v628
        %694 = vmatprep.subr.bf16.mxu0 %v631
        %695 = vmatpush1.bf16.msra.mxu0 %v630
        %696 = vmatprep.subr.bf16.mxu0 %v633
        %697 = vmatpush1.bf16.msra.mxu0 %v632
        %698 = vmatprep.subr.bf16.mxu0 %v635
        %699 = vmatpush1.bf16.msra.mxu0 %v634
        %700 = vmatprep.subr.bf16.mxu0 %v637
        %701 = vmatpush1.bf16.msra.mxu0 %v636
        %702 = vmatprep.subr.bf16.mxu0 %v639
        %703 = vmatpush1.bf16.msra.mxu0 %v638
        %704 = vmatprep.subr.bf16.mxu0 %v641
        %705 = vmatpush1.bf16.msra.mxu0 %v640
        %706 = vmatprep.subr.bf16.mxu0 %v643
        %707 = vmatpush1.bf16.msra.mxu0 %v642
        %708 = vmatprep.subr.bf16.mxu0 %v645
        %709 = vmatpush1.bf16.msra.mxu0 %v644
        %710 = vmatprep.subr.bf16.mxu0 %v647
        %711 = vmatpush1.bf16.msra.mxu0 %v646
        %712 = vmatprep.subr.bf16.mxu0 %v649
        %713 = vmatpush1.bf16.msra.mxu0 %v648
        %714 = vmatprep.subr.bf16.mxu0 %v651
        %715 = vmatpush1.bf16.msra.mxu0 %v650
        %716 = vmatprep.subr.bf16.mxu0 %v653
        %717 = vmatpush1.bf16.msra.mxu0 %v652
        %718 = vmatprep.subr.bf16.mxu0 %v655
        %719 = vmatpush1.bf16.msra.mxu0 %v654
        %720 = vmatprep.subr.bf16.mxu0 %v657
        %721 = vmatpush1.bf16.msra.mxu0 %v656
        %722 = vmatprep.mubr.bf16.mxu0 %v483
        %723 = vmatmul.mubr.bf16.gmra.mrb[0].mxu0 %v482
        %v724 = vpop.f32.mrb[0].mxu0
        %v725 = vadd.f32 %v523, %v724
        %v726 = vpop.f32.mrb[0].mxu0
        %v727 = vadd.f32 %v527, %v726
        %v728 = vpop.f32.mrb[0].mxu0
        %v729 = vpop.f32.mrb[0].mxu0
        %730 = vdwg.mxu0
        %v731 = vmax.f32 %v725, 0.0
        %v732 = vmax.f32 %v727, 0.0
        %v733 = vld [vmem:[#allocation2] sm:$0xff]
        %v734 = vld [vmem:[#allocation2 + $0x8] sm:$0xff]
        %v735 = vld [vmem:[#allocation2 + $0x10] sm:$0xff]
        %v736 = vld [vmem:[#allocation2 + $0x18] sm:$0xff]
        %v737 = vld [vmem:[#allocation2 + $0x20] sm:$0xff]
        %v738 = vld [vmem:[#allocation2 + $0x28] sm:$0xff]
        %v739 = vld [vmem:[#allocation2 + $0x30] sm:$0xff]
        %v740 = vld [vmem:[#allocation2 + $0x38] sm:$0xff]
        %v741 = vld [vmem:[#allocation2 + $0x40] sm:$0xff]
        %v742 = vld [vmem:[#allocation2 + $0x48] sm:$0xff]
        %v743 = vld [vmem:[#allocation2 + $0x50] sm:$0xff]
        %v744 = vld [vmem:[#allocation2 + $0x58] sm:$0xff]
        %v745 = vld [vmem:[#allocation2 + $0x60] sm:$0xff]
        %v746 = vld [vmem:[#allocation2 + $0x68] sm:$0xff]
        %v747 = vld [vmem:[#allocation2 + $0x70] sm:$0xff]
        %v748 = vld [vmem:[#allocation2 + $0x78] sm:$0xff]
        %v749 = vld [vmem:[#allocation2 + $0x80] sm:$0xff]
        %v750 = vld [vmem:[#allocation2 + $0x88] sm:$0xff]
        %v751 = vld [vmem:[#allocation2 + $0x90] sm:$0xff]
        %v752 = vld [vmem:[#allocation2 + $0x98] sm:$0xff]
        %v753 = vld [vmem:[#allocation2 + $0xa0] sm:$0xff]
        %v754 = vld [vmem:[#allocation2 + $0xa8] sm:$0xff]
        %v755 = vld [vmem:[#allocation2 + $0xb0] sm:$0xff]
        %v756 = vld [vmem:[#allocation2 + $0xb8] sm:$0xff]
        %v757 = vld [vmem:[#allocation2 + $0xc0] sm:$0xff]
        %v758 = vld [vmem:[#allocation2 + $0xc8] sm:$0xff]
        %v759 = vld [vmem:[#allocation2 + $0xd0] sm:$0xff]
        %v760 = vld [vmem:[#allocation2 + $0xd8] sm:$0xff]
        %v761 = vld [vmem:[#allocation2 + $0xe0] sm:$0xff]
        %v762 = vld [vmem:[#allocation2 + $0xe8] sm:$0xff]
        %v763 = vld [vmem:[#allocation2 + $0xf0] sm:$0xff]
        %v764 = vld [vmem:[#allocation2 + $0xf8] sm:$0xff]
        %v765 = vld [vmem:[%s6] sm:$0x3]
        %v767 = vlaneseq
        %v768 = vshrl.u32 %v767, 7
        %v769 = vsub.s32 0, %v768
        %v770 = vrot.slane %v765, %v769
        %v771 = vlaneseq
        %v772 = vshrl.u32 %v771, 7
        %v773 = vsub.s32 1, %v772
        %v774 = vrot.slane %v765, %v773
        %v809 = vunpack.c.l.b16 %v733
        %v810 = vunpack.c.h.b16 %v733
        %v811 = vunpack.c.l.b16 %v734
        %v812 = vunpack.c.h.b16 %v734
        %v813 = vunpack.c.l.b16 %v735
        %v814 = vunpack.c.h.b16 %v735
        %v815 = vunpack.c.l.b16 %v736
        %v816 = vunpack.c.h.b16 %v736
        %v817 = vunpack.c.l.b16 %v737
        %v818 = vunpack.c.h.b16 %v737
        %v819 = vunpack.c.l.b16 %v738
        %v820 = vunpack.c.h.b16 %v738
        %v821 = vunpack.c.l.b16 %v739
        %v822 = vunpack.c.h.b16 %v739
        %v823 = vunpack.c.l.b16 %v740
        %v824 = vunpack.c.h.b16 %v740
        %v825 = vunpack.c.l.b16 %v741
        %v826 = vunpack.c.h.b16 %v741
        %v827 = vunpack.c.l.b16 %v742
        %v828 = vunpack.c.h.b16 %v742
        %v829 = vunpack.c.l.b16 %v743
        %v830 = vunpack.c.h.b16 %v743
        %v831 = vunpack.c.l.b16 %v744
        %v832 = vunpack.c.h.b16 %v744
        %v833 = vunpack.c.l.b16 %v745
        %v834 = vunpack.c.h.b16 %v745
        %v835 = vunpack.c.l.b16 %v746
        %v836 = vunpack.c.h.b16 %v746
        %v837 = vunpack.c.l.b16 %v747
        %v838 = vunpack.c.h.b16 %v747
        %v839 = vunpack.c.l.b16 %v748
        %v840 = vunpack.c.h.b16 %v748
        %v841 = vunpack.c.l.b16 %v749
        %v842 = vunpack.c.h.b16 %v749
        %v843 = vunpack.c.l.b16 %v750
        %v844 = vunpack.c.h.b16 %v750
        %v845 = vunpack.c.l.b16 %v751
        %v846 = vunpack.c.h.b16 %v751
        %v847 = vunpack.c.l.b16 %v752
        %v848 = vunpack.c.h.b16 %v752
        %v849 = vunpack.c.l.b16 %v753
        %v850 = vunpack.c.h.b16 %v753
        %v851 = vunpack.c.l.b16 %v754
        %v852 = vunpack.c.h.b16 %v754
        %v853 = vunpack.c.l.b16 %v755
        %v854 = vunpack.c.h.b16 %v755
        %v855 = vunpack.c.l.b16 %v756
        %v856 = vunpack.c.h.b16 %v756
        %v857 = vunpack.c.l.b16 %v757
        %v858 = vunpack.c.h.b16 %v757
        %v859 = vunpack.c.l.b16 %v758
        %v860 = vunpack.c.h.b16 %v758
        %v861 = vunpack.c.l.b16 %v759
        %v862 = vunpack.c.h.b16 %v759
        %v863 = vunpack.c.l.b16 %v760
        %v864 = vunpack.c.h.b16 %v760
        %v865 = vunpack.c.l.b16 %v761
        %v866 = vunpack.c.h.b16 %v761
        %v867 = vunpack.c.l.b16 %v762
        %v868 = vunpack.c.h.b16 %v762
        %v869 = vunpack.c.l.b16 %v763
        %v870 = vunpack.c.h.b16 %v763
        %v871 = vunpack.c.l.b16 %v764
        %v872 = vunpack.c.h.b16 %v764
        %v873 = vpack.c.b16 %v811, %v809
        %v874 = vpack.c.b16 %v812, %v810
        %v875 = vpack.c.b16 %v815, %v813
        %v876 = vpack.c.b16 %v816, %v814
        %v877 = vpack.c.b16 %v819, %v817
        %v878 = vpack.c.b16 %v820, %v818
        %v879 = vpack.c.b16 %v823, %v821
        %v880 = vpack.c.b16 %v824, %v822
        %v881 = vpack.c.b16 %v827, %v825
        %v882 = vpack.c.b16 %v828, %v826
        %v883 = vpack.c.b16 %v831, %v829
        %v884 = vpack.c.b16 %v832, %v830
        %v885 = vpack.c.b16 %v835, %v833
        %v886 = vpack.c.b16 %v836, %v834
        %v887 = vpack.c.b16 %v839, %v837
        %v888 = vpack.c.b16 %v840, %v838
        %v889 = vpack.c.b16 %v843, %v841
        %v890 = vpack.c.b16 %v844, %v842
        %v891 = vpack.c.b16 %v847, %v845
        %v892 = vpack.c.b16 %v848, %v846
        %v893 = vpack.c.b16 %v851, %v849
        %v894 = vpack.c.b16 %v852, %v850
        %v895 = vpack.c.b16 %v855, %v853
        %v896 = vpack.c.b16 %v856, %v854
        %v897 = vpack.c.b16 %v859, %v857
        %v898 = vpack.c.b16 %v860, %v858
        %v899 = vpack.c.b16 %v863, %v861
        %v900 = vpack.c.b16 %v864, %v862
        %v901 = vpack.c.b16 %v867, %v865
        %v902 = vpack.c.b16 %v868, %v866
        %v903 = vpack.c.b16 %v871, %v869
        %v904 = vpack.c.b16 %v872, %v870
        %937 = vmatprep.subr.bf16.mxu0 %v874
        %938 = vmatpush1.bf16.msra.mxu0 %v873
        %939 = vmatprep.subr.bf16.mxu0 %v876
        %940 = vmatpush1.bf16.msra.mxu0 %v875
        %941 = vmatprep.subr.bf16.mxu0 %v878
        %942 = vmatpush1.bf16.msra.mxu0 %v877
        %943 = vmatprep.subr.bf16.mxu0 %v880
        %944 = vmatpush1.bf16.msra.mxu0 %v879
        %945 = vmatprep.subr.bf16.mxu0 %v882
        %946 = vmatpush1.bf16.msra.mxu0 %v881
        %947 = vmatprep.subr.bf16.mxu0 %v884
        %948 = vmatpush1.bf16.msra.mxu0 %v883
        %949 = vmatprep.subr.bf16.mxu0 %v886
        %950 = vmatpush1.bf16.msra.mxu0 %v885
        %951 = vmatprep.subr.bf16.mxu0 %v888
        %952 = vmatpush1.bf16.msra.mxu0 %v887
        %953 = vmatprep.subr.bf16.mxu0 %v890
        %954 = vmatpush1.bf16.msra.mxu0 %v889
        %955 = vmatprep.subr.bf16.mxu0 %v892
        %956 = vmatpush1.bf16.msra.mxu0 %v891
        %957 = vmatprep.subr.bf16.mxu0 %v894
        %958 = vmatpush1.bf16.msra.mxu0 %v893
        %959 = vmatprep.subr.bf16.mxu0 %v896
        %960 = vmatpush1.bf16.msra.mxu0 %v895
        %961 = vmatprep.subr.bf16.mxu0 %v898
        %962 = vmatpush1.bf16.msra.mxu0 %v897
        %963 = vmatprep.subr.bf16.mxu0 %v900
        %964 = vmatpush1.bf16.msra.mxu0 %v899
        %965 = vmatprep.subr.bf16.mxu0 %v902
        %966 = vmatpush1.bf16.msra.mxu0 %v901
        %967 = vmatprep.subr.bf16.mxu0 %v904
        %968 = vmatpush1.bf16.msra.mxu0 %v903
        %969 = vmatprep.mubr.bf16.mxu0 %v485
        %970 = vmatmul.mubr.bf16.gmra.mrb[0].mxu0 %v484
        %v971 = vpop.f32.mrb[0].mxu0
        %v972 = vadd.f32 %v770, %v971
        %v973 = vpop.f32.mrb[0].mxu0
        %v974 = vadd.f32 %v774, %v973
        %v975 = vpop.f32.mrb[0].mxu0
        %v976 = vpop.f32.mrb[0].mxu0
        %977 = vdwg.mxu0
        %v978 = vmax.f32 %v972, 0.0
        %v979 = vmax.f32 %v974, 0.0
        %v980 = vpack.c.bf16 %v731, %v731
        %v981 = vpack.c.bf16 %v732, %v732
        %v982 = vpack.c.bf16 %v978, %v978
        %v983 = vpack.c.bf16 %v979, %v979
        %v984 = vld [vmem:[%s7] sm:$0xf]
        %v985 = vld [vmem:[%s7 + $0x4] sm:$0xf]
        %v986 = vld [vmem:[%s7 + $0x8] sm:$0xf]
        %v987 = vld [vmem:[%s7 + $0xc] sm:$0xf]
        %v988 = vld [vmem:[%s7 + $0x10] sm:$0xf]
        %v989 = vld [vmem:[%s7 + $0x14] sm:$0xf]
        %v990 = vld [vmem:[%s7 + $0x18] sm:$0xf]
        %v991 = vld [vmem:[%s7 + $0x1c] sm:$0xf]
        %v992 = vld [vmem:[%s7 + $0x20] sm:$0xf]
        %v993 = vld [vmem:[%s7 + $0x24] sm:$0xf]
        %v994 = vld [vmem:[%s7 + $0x28] sm:$0xf]
        %v995 = vld [vmem:[%s7 + $0x2c] sm:$0xf]
        %v996 = vld [vmem:[%s7 + $0x30] sm:$0xf]
        %v997 = vld [vmem:[%s7 + $0x34] sm:$0xf]
        %v998 = vld [vmem:[%s7 + $0x38] sm:$0xf]
        %v999 = vld [vmem:[%s7 + $0x3c] sm:$0xf]
        %v1000 = vld [vmem:[%s7 + $0x40] sm:$0xf]
        %v1001 = vld [vmem:[%s7 + $0x44] sm:$0xf]
        %v1002 = vld [vmem:[%s7 + $0x48] sm:$0xf]
        %v1003 = vld [vmem:[%s7 + $0x4c] sm:$0xf]
        %v1004 = vld [vmem:[%s7 + $0x50] sm:$0xf]
        %v1005 = vld [vmem:[%s7 + $0x54] sm:$0xf]
        %v1006 = vld [vmem:[%s7 + $0x58] sm:$0xf]
        %v1007 = vld [vmem:[%s7 + $0x5c] sm:$0xf]
        %v1008 = vld [vmem:[%s7 + $0x60] sm:$0xf]
        %v1009 = vld [vmem:[%s7 + $0x64] sm:$0xf]
        %v1010 = vld [vmem:[%s7 + $0x68] sm:$0xf]
        %v1011 = vld [vmem:[%s7 + $0x6c] sm:$0xf]
        %v1012 = vld [vmem:[%s7 + $0x70] sm:$0xf]
        %v1013 = vld [vmem:[%s7 + $0x74] sm:$0xf]
        %v1014 = vld [vmem:[%s7 + $0x78] sm:$0xf]
        %v1015 = vld [vmem:[%s7 + $0x7c] sm:$0xf]
        %v1016 = vld [vmem:[%s7 + $0x80] sm:$0xf]
        %v1017 = vld [vmem:[%s7 + $0x84] sm:$0xf]
        %v1018 = vld [vmem:[%s7 + $0x88] sm:$0xf]
        %v1019 = vld [vmem:[%s7 + $0x8c] sm:$0xf]
        %v1020 = vld [vmem:[%s7 + $0x90] sm:$0xf]
        %v1021 = vld [vmem:[%s7 + $0x94] sm:$0xf]
        %v1022 = vld [vmem:[%s7 + $0x98] sm:$0xf]
        %v1023 = vld [vmem:[%s7 + $0x9c] sm:$0xf]
        %v1024 = vld [vmem:[%s7 + $0xa0] sm:$0xf]
        %v1025 = vld [vmem:[%s7 + $0xa4] sm:$0xf]
        %v1026 = vld [vmem:[%s7 + $0xa8] sm:$0xf]
        %v1027 = vld [vmem:[%s7 + $0xac] sm:$0xf]
        %v1028 = vld [vmem:[%s7 + $0xb0] sm:$0xf]
        %v1029 = vld [vmem:[%s7 + $0xb4] sm:$0xf]
        %v1030 = vld [vmem:[%s7 + $0xb8] sm:$0xf]
        %v1031 = vld [vmem:[%s7 + $0xbc] sm:$0xf]
        %v1032 = vld [vmem:[%s7 + $0xc0] sm:$0xf]
        %v1033 = vld [vmem:[%s7 + $0xc4] sm:$0xf]
        %v1034 = vld [vmem:[%s7 + $0xc8] sm:$0xf]
        %v1035 = vld [vmem:[%s7 + $0xcc] sm:$0xf]
        %v1036 = vld [vmem:[%s7 + $0xd0] sm:$0xf]
        %v1037 = vld [vmem:[%s7 + $0xd4] sm:$0xf]
        %v1038 = vld [vmem:[%s7 + $0xd8] sm:$0xf]
        %v1039 = vld [vmem:[%s7 + $0xdc] sm:$0xf]
        %v1040 = vld [vmem:[%s7 + $0xe0] sm:$0xf]
        %v1041 = vld [vmem:[%s7 + $0xe4] sm:$0xf]
        %v1042 = vld [vmem:[%s7 + $0xe8] sm:$0xf]
        %v1043 = vld [vmem:[%s7 + $0xec] sm:$0xf]
        %v1044 = vld [vmem:[%s7 + $0xf0] sm:$0xf]
        %v1045 = vld [vmem:[%s7 + $0xf4] sm:$0xf]
        %v1046 = vld [vmem:[%s7 + $0xf8] sm:$0xf]
        %v1047 = vld [vmem:[%s7 + $0xfc] sm:$0xf]
        %v1048 = vld [vmem:[%s8] sm:$0x1]
        %v1050 = vlaneseq
        %v1051 = vshrl.u32 %v1050, 7
        %v1052 = vsub.s32 0, %v1051
        %v1053 = vrot.slane %v1048, %v1052
        %v1119 = vunpack.c.l.b16 %v984
        %v1120 = vunpack.c.l.b16 %v985
        %v1121 = vunpack.c.l.b16 %v986
        %v1122 = vunpack.c.l.b16 %v987
        %v1123 = vunpack.c.l.b16 %v988
        %v1124 = vunpack.c.l.b16 %v989
        %v1125 = vunpack.c.l.b16 %v990
        %v1126 = vunpack.c.l.b16 %v991
        %v1127 = vunpack.c.l.b16 %v992
        %v1128 = vunpack.c.l.b16 %v993
        %v1129 = vunpack.c.l.b16 %v994
        %v1130 = vunpack.c.l.b16 %v995
        %v1131 = vunpack.c.l.b16 %v996
        %v1132 = vunpack.c.l.b16 %v997
        %v1133 = vunpack.c.l.b16 %v998
        %v1134 = vunpack.c.l.b16 %v999
        %v1135 = vunpack.c.l.b16 %v1000
        %v1136 = vunpack.c.l.b16 %v1001
        %v1137 = vunpack.c.l.b16 %v1002
        %v1138 = vunpack.c.l.b16 %v1003
        %v1139 = vunpack.c.l.b16 %v1004
        %v1140 = vunpack.c.l.b16 %v1005
        %v1141 = vunpack.c.l.b16 %v1006
        %v1142 = vunpack.c.l.b16 %v1007
        %v1143 = vunpack.c.l.b16 %v1008
        %v1144 = vunpack.c.l.b16 %v1009
        %v1145 = vunpack.c.l.b16 %v1010
        %v1146 = vunpack.c.l.b16 %v1011
        %v1147 = vunpack.c.l.b16 %v1012
        %v1148 = vunpack.c.l.b16 %v1013
        %v1149 = vunpack.c.l.b16 %v1014
        %v1150 = vunpack.c.l.b16 %v1015
        %v1151 = vunpack.c.l.b16 %v1016
        %v1152 = vunpack.c.l.b16 %v1017
        %v1153 = vunpack.c.l.b16 %v1018
        %v1154 = vunpack.c.l.b16 %v1019
        %v1155 = vunpack.c.l.b16 %v1020
        %v1156 = vunpack.c.l.b16 %v1021
        %v1157 = vunpack.c.l.b16 %v1022
        %v1158 = vunpack.c.l.b16 %v1023
        %v1159 = vunpack.c.l.b16 %v1024
        %v1160 = vunpack.c.l.b16 %v1025
        %v1161 = vunpack.c.l.b16 %v1026
        %v1162 = vunpack.c.l.b16 %v1027
        %v1163 = vunpack.c.l.b16 %v1028
        %v1164 = vunpack.c.l.b16 %v1029
        %v1165 = vunpack.c.l.b16 %v1030
        %v1166 = vunpack.c.l.b16 %v1031
        %v1167 = vunpack.c.l.b16 %v1032
        %v1168 = vunpack.c.l.b16 %v1033
        %v1169 = vunpack.c.l.b16 %v1034
        %v1170 = vunpack.c.l.b16 %v1035
        %v1171 = vunpack.c.l.b16 %v1036
        %v1172 = vunpack.c.l.b16 %v1037
        %v1173 = vunpack.c.l.b16 %v1038
        %v1174 = vunpack.c.l.b16 %v1039
        %v1175 = vunpack.c.l.b16 %v1040
        %v1176 = vunpack.c.l.b16 %v1041
        %v1177 = vunpack.c.l.b16 %v1042
        %v1178 = vunpack.c.l.b16 %v1043
        %v1179 = vunpack.c.l.b16 %v1044
        %v1180 = vunpack.c.l.b16 %v1045
        %v1181 = vunpack.c.l.b16 %v1046
        %v1182 = vunpack.c.l.b16 %v1047
        %v1183 = vpack.c.b16 %v1120, %v1119
        %v1184 = vpack.c.b16 %v1122, %v1121
        %v1185 = vpack.c.b16 %v1124, %v1123
        %v1186 = vpack.c.b16 %v1126, %v1125
        %v1187 = vpack.c.b16 %v1128, %v1127
        %v1188 = vpack.c.b16 %v1130, %v1129
        %v1189 = vpack.c.b16 %v1132, %v1131
        %v1190 = vpack.c.b16 %v1134, %v1133
        %v1191 = vpack.c.b16 %v1136, %v1135
        %v1192 = vpack.c.b16 %v1138, %v1137
        %v1193 = vpack.c.b16 %v1140, %v1139
        %v1194 = vpack.c.b16 %v1142, %v1141
        %v1195 = vpack.c.b16 %v1144, %v1143
        %v1196 = vpack.c.b16 %v1146, %v1145
        %v1197 = vpack.c.b16 %v1148, %v1147
        %v1198 = vpack.c.b16 %v1150, %v1149
        %v1199 = vpack.c.b16 %v1152, %v1151
        %v1200 = vpack.c.b16 %v1154, %v1153
        %v1201 = vpack.c.b16 %v1156, %v1155
        %v1202 = vpack.c.b16 %v1158, %v1157
        %v1203 = vpack.c.b16 %v1160, %v1159
        %v1204 = vpack.c.b16 %v1162, %v1161
        %v1205 = vpack.c.b16 %v1164, %v1163
        %v1206 = vpack.c.b16 %v1166, %v1165
        %v1207 = vpack.c.b16 %v1168, %v1167
        %v1208 = vpack.c.b16 %v1170, %v1169
        %v1209 = vpack.c.b16 %v1172, %v1171
        %v1210 = vpack.c.b16 %v1174, %v1173
        %v1211 = vpack.c.b16 %v1176, %v1175
        %v1212 = vpack.c.b16 %v1178, %v1177
        %v1213 = vpack.c.b16 %v1180, %v1179
        %v1214 = vpack.c.b16 %v1182, %v1181
        %1247 = vmatprep.subr.bf16.mxu0 0
        %1248 = vmatpush1.bf16.msra.mxu0 %v1183
        %1249 = vmatprep.subr.bf16.mxu0 0
        %1250 = vmatpush1.bf16.msra.mxu0 %v1184
        %1251 = vmatprep.subr.bf16.mxu0 0
        %1252 = vmatpush1.bf16.msra.mxu0 %v1185
        %1253 = vmatprep.subr.bf16.mxu0 0
        %1254 = vmatpush1.bf16.msra.mxu0 %v1186
        %1255 = vmatprep.subr.bf16.mxu0 0
        %1256 = vmatpush1.bf16.msra.mxu0 %v1187
        %1257 = vmatprep.subr.bf16.mxu0 0
        %1258 = vmatpush1.bf16.msra.mxu0 %v1188
        %1259 = vmatprep.subr.bf16.mxu0 0
        %1260 = vmatpush1.bf16.msra.mxu0 %v1189
        %1261 = vmatprep.subr.bf16.mxu0 0
        %1262 = vmatpush1.bf16.msra.mxu0 %v1190
        %1263 = vmatprep.subr.bf16.mxu0 0
        %1264 = vmatpush1.bf16.msra.mxu0 %v1191
        %1265 = vmatprep.subr.bf16.mxu0 0
        %1266 = vmatpush1.bf16.msra.mxu0 %v1192
        %1267 = vmatprep.subr.bf16.mxu0 0
        %1268 = vmatpush1.bf16.msra.mxu0 %v1193
        %1269 = vmatprep.subr.bf16.mxu0 0
        %1270 = vmatpush1.bf16.msra.mxu0 %v1194
        %1271 = vmatprep.subr.bf16.mxu0 0
        %1272 = vmatpush1.bf16.msra.mxu0 %v1195
        %1273 = vmatprep.subr.bf16.mxu0 0
        %1274 = vmatpush1.bf16.msra.mxu0 %v1196
        %1275 = vmatprep.subr.bf16.mxu0 0
        %1276 = vmatpush1.bf16.msra.mxu0 %v1197
        %1277 = vmatprep.subr.bf16.mxu0 0
        %1278 = vmatpush1.bf16.msra.mxu0 %v1198
        %1279 = vmatprep.mubr.bf16.mxu0 %v981
        %1280 = vmatmul.mubr.bf16.gmra.mrb[0].mxu0 %v980
        %v1281 = vpop.f32.mrb[0].mxu0
        %v1282 = vadd.f32 %v1053, %v1281
        %v1283 = vpop.f32.mrb[0].mxu0
        %v1284 = vpop.f32.mrb[0].mxu0
        %v1285 = vpop.f32.mrb[0].mxu0
        %1286 = vdwg.mxu0
        %1287 = vmatprep.subr.bf16.mxu0 0
        %1288 = vmatpush1.bf16.msra.mxu0 %v1199
        %1289 = vmatprep.subr.bf16.mxu0 0
        %1290 = vmatpush1.bf16.msra.mxu0 %v1200
        %1291 = vmatprep.subr.bf16.mxu0 0
        %1292 = vmatpush1.bf16.msra.mxu0 %v1201
        %1293 = vmatprep.subr.bf16.mxu0 0
        %1294 = vmatpush1.bf16.msra.mxu0 %v1202
        %1295 = vmatprep.subr.bf16.mxu0 0
        %1296 = vmatpush1.bf16.msra.mxu0 %v1203
        %1297 = vmatprep.subr.bf16.mxu0 0
        %1298 = vmatpush1.bf16.msra.mxu0 %v1204
        %1299 = vmatprep.subr.bf16.mxu0 0
        %1300 = vmatpush1.bf16.msra.mxu0 %v1205
        %1301 = vmatprep.subr.bf16.mxu0 0
        %1302 = vmatpush1.bf16.msra.mxu0 %v1206
        %1303 = vmatprep.subr.bf16.mxu0 0
        %1304 = vmatpush1.bf16.msra.mxu0 %v1207
        %1305 = vmatprep.subr.bf16.mxu0 0
        %1306 = vmatpush1.bf16.msra.mxu0 %v1208
        %1307 = vmatprep.subr.bf16.mxu0 0
        %1308 = vmatpush1.bf16.msra.mxu0 %v1209
        %1309 = vmatprep.subr.bf16.mxu0 0
        %1310 = vmatpush1.bf16.msra.mxu0 %v1210
        %1311 = vmatprep.subr.bf16.mxu0 0
        %1312 = vmatpush1.bf16.msra.mxu0 %v1211
        %1313 = vmatprep.subr.bf16.mxu0 0
        %1314 = vmatpush1.bf16.msra.mxu0 %v1212
        %1315 = vmatprep.subr.bf16.mxu0 0
        %1316 = vmatpush1.bf16.msra.mxu0 %v1213
        %1317 = vmatprep.subr.bf16.mxu0 0
        %1318 = vmatpush1.bf16.msra.mxu0 %v1214
        %1319 = vmatprep.mubr.bf16.mxu0 %v983
        %1320 = vmatmul.mubr.bf16.gmra.mrb[0].mxu0 %v982
        %v1321 = vpop.f32.mrb[0].mxu0
        %v1322 = vadd.f32 %v1282, %v1321
        %v1323 = vpop.f32.mrb[0].mxu0
        %v1324 = vpop.f32.mrb[0].mxu0
        %v1325 = vpop.f32.mrb[0].mxu0
        %1326 = vdwg.mxu0
        %vm1327 = vcmask 15360
        %1328 = vst.msk [vmem:[%s342] sm:$0xff] %vm1327, %v1322
        %p1329 = scmp.lt.s32.totalorder %s21, 2
        %s1330 = scalar_select %p1329, %s21, 2
        %s1331 = smul.addr %s1330, 8
        %s1332 = scalar_lea.vmem %s9, %s1331
        // Predicated region
        $region61: #{tpu_custom_call.1} parent=55 // pred_check
          %p1333 = pneg %p233
        $region62: #{tpu_custom_call.1} parent=55 // pred_check_branch
          %1335 = sbr.rel (%p1333) target = $region64
        $region63: #{tpu_custom_call.1} parent=55 // pred_region
          _
        $region64: #{tpu_custom_call.1} parent=55 // pred_fallthru
          _
      $region56: #{tpu_custom_call.1} parent=5 // pred_fallthru
        _
      %p1336 = scmp.le.s32.totalorder 2, %s16
      // Predicated region
      $region65: #{tpu_custom_call.1} parent=5 // pred_check
        %p1337 = pneg %p1336
      $region66: #{tpu_custom_call.1} parent=5 // pred_check_branch
        %1339 = sbr.rel (%p1337) target = $region68
      $region67: #{tpu_custom_call.1} parent=5 // pred_region
        %s1340 = ssub.s32 %s16, 2
        // Predicated region
        $region69: #{tpu_custom_call.1} parent=67 // pred_check
          %p1341 = pneg %p239
        $region70: #{tpu_custom_call.1} parent=67 // pred_check_branch
          %1343 = sbr.rel (%p1341) target = $region72
        $region71: #{tpu_custom_call.1} parent=67 // pred_region
          %p1344 = scmp.lt.s32.totalorder %s22, 2
          %s1345 = scalar_select %p1344, %s22, 2
          %s1346 = smul.addr %s1345, 8
          %s1347 = scalar_lea.vmem %s9, %s1346
        $region72: #{tpu_custom_call.1} parent=67 // pred_fallthru
          _
      $region68: #{tpu_custom_call.1} parent=5 // pred_fallthru
        _
    $region6: #{tpu_custom_call.1} parent=1 // loop_footer
      %s20 = sadd.s32 1, %s16
    $region7: #{tpu_custom_call.1} parent=1 // loop_footer_branch
      %15 = sbr.rel target = $region3
    $region8: #{tpu_custom_call.1} parent=1 // loop_exit
      _
    %1348 = vsyncpa [#allocation3], 1
    %s1349 = scalar_lea.sflag [#allocation3], 1
    %1350 = vsyncpa %s1349, 1

</llo_original>
